<compile_context>
chip_gen: v7x
topology: tpu7x:2x2x1
jax: 0.10.0
libtpu: 0.0.40
codegen_flags: <defaults>
</compile_context>

<pallas_src>
import functools

import jax
import jax.numpy as jnp
from jax.experimental import pallas as pl
from jax.experimental.pallas import tpu as pltpu

_SUBLANE = 8
_TARGET_BLOCK_BYTES = 2 * 1024 * 1024   # ~2 MiB payload per grid step (per side)
_VMEM_LIMIT_BYTES = 32 * 1024 * 1024    # comfortably inside v5e/v6e/v7x scoped VMEM


def _cdiv(a, b):
    return -(-a // b)


def _ceil_to(a, m):
    return _cdiv(a, m) * m


def _pick_row_tile(rows, bytes_per_row, batch):
    """Largest multiple-of-8 row tile under the per-step byte target; keeps at
    least two grid steps (when possible) so both v7x TensorCores are used."""
    rt = max(_SUBLANE,
             (_TARGET_BLOCK_BYTES // max(bytes_per_row, 1)) // _SUBLANE * _SUBLANE)
    rt = min(rt, _ceil_to(rows, _SUBLANE))
    if batch * _cdiv(rows, rt) < 2 and rows > _SUBLANE:
        rt = _ceil_to(_cdiv(rows, 2), _SUBLANE)
    return rt


def _compiler_params(allow_input_fusion=None):
    return pltpu.CompilerParams(
        dimension_semantics=("parallel", "parallel"),
        vmem_limit_bytes=_VMEM_LIMIT_BYTES,
        allow_input_fusion=allow_input_fusion)


def _cost(nelems, itemsize):
    # ~3 add/sub (+ amortized scale) per element; memory bound either way.
    return pl.CostEstimate(flops=3 * nelems, transcendentals=0,
                           bytes_accessed=2 * nelems * itemsize)


# ------------------------------ kernel bodies --------------------------------

def _haar_butterfly(a, b, c, d):
    """4-point Haar sign matrix (symmetric, so it serves both directions)."""
    s0, d0 = a + b, a - b
    s1, d1 = c + d, c - d
    return s0 + s1, d0 + d1, s0 - s1, d0 - d1


def _fwd_fused_kernel(x_ref, o_ref):
    """x_ref: (row_tile, 2W), one row = [x[2i, :] | x[2i+1, :]].
    o_ref: (4, row_tile, W/2) -- one dense slab per Haar component."""
    w = x_ref.shape[-1] // 2
    wh = w // 2
    f32 = jnp.float32
    # Stride-2 lane reads peel the four 2x2 taps; the shuffle lands on the XLU
    # slot and overlaps with the VPU butterfly and the stores.
    a = x_ref[:, pl.ds(0, wh, stride=2)].astype(f32)        # x[2i  , 2j  ]
    b = x_ref[:, pl.ds(1, wh, stride=2)].astype(f32)        # x[2i  , 2j+1]
    c = x_ref[:, pl.ds(w, wh, stride=2)].astype(f32)        # x[2i+1, 2j  ]
    d = x_ref[:, pl.ds(w + 1, wh, stride=2)].astype(f32)    # x[2i+1, 2j+1]
    k0, k1, k2, k3 = _haar_butterfly(a, b, c, d)
    dt = o_ref.dtype
    o_ref[0] = (k0 * 0.25).astype(dt)
    o_ref[1] = (k1 * 0.25).astype(dt)
    o_ref[2] = (k2 * 0.25).astype(dt)
    o_ref[3] = (k3 * 0.25).astype(dt)


def _rev_fused_kernel(z_ref, o_ref):
    """z_ref: (4, row_tile, W2); o_ref: (row_tile, 4*W2), one row =
    [recon row 2i (interleaved cols) | recon row 2i+1 (interleaved cols)]."""
    w2 = z_ref.shape[-1]
    f32 = jnp.float32
    r00, r01, r10, r11 = _haar_butterfly(
        z_ref[0].astype(f32), z_ref[1].astype(f32),
        z_ref[2].astype(f32), z_ref[3].astype(f32))
    dt = o_ref.dtype
    # Stride-2 lane stores interleave rows/columns directly in the output
    # block, so no post-kernel transpose pass is needed.
    o_ref[:, pl.ds(0, w2, stride=2)] = r00.astype(dt)             # (2i  , 2j  )
    o_ref[:, pl.ds(1, w2, stride=2)] = r01.astype(dt)             # (2i  , 2j+1)
    o_ref[:, pl.ds(2 * w2, w2, stride=2)] = r10.astype(dt)        # (2i+1, 2j  )
    o_ref[:, pl.ds(2 * w2 + 1, w2, stride=2)] = r11.astype(dt)    # (2i+1, 2j+1)


def _planar_kernel(i_ref, o_ref, *, scale):
    """Fallback butterfly: i_ref/o_ref are (4, row_tile, cols) planar stacks."""
    f32 = jnp.float32
    k0, k1, k2, k3 = _haar_butterfly(
        i_ref[0].astype(f32), i_ref[1].astype(f32),
        i_ref[2].astype(f32), i_ref[3].astype(f32))
    dt = o_ref.dtype
    o_ref[0] = (k0 * scale).astype(dt)
    o_ref[1] = (k1 * scale).astype(dt)
    o_ref[2] = (k2 * scale).astype(dt)
    o_ref[3] = (k3 * scale).astype(dt)


# ------------------------- lane-stride capability probe ----------------------

@functools.lru_cache(maxsize=None)
def _lane_stride_ok():
    """True iff stride-2 lane reads/writes on VMEM refs lower (and are correct)
    on this toolchain; otherwise the wrappers use the planar fallback path."""
    def probe(x_ref, o_ref):
        n = x_ref.shape[-1] // 2
        o_ref[:, 0:n] = x_ref[:, pl.ds(0, n, stride=2)]             # strided load
        o_ref[:, n:2 * n] = x_ref[:, pl.ds(1, n, stride=2)]
        o_ref[:, pl.ds(2 * n, n, stride=2)] = x_ref[:, 0:n]         # strided store
        o_ref[:, pl.ds(2 * n + 1, n, stride=2)] = x_ref[:, n:2 * n]

    try:
        x = jnp.arange(8 * 256, dtype=jnp.float32).reshape(8, 256)
        got = jax.block_until_ready(
            pl.pallas_call(
                probe, out_shape=jax.ShapeDtypeStruct((8, 512), jnp.float32))(x))
        want = jnp.concatenate(
            [x[:, 0::2], x[:, 1::2],
             jnp.stack([x[:, :128], x[:, 128:]], axis=-1).reshape(8, 256)],
            axis=-1)
        return bool(jnp.array_equal(got, want))
    except Exception:  # lowering / Mosaic compile failure -> safe planar path
        return False


# --------------------------------- wrappers -----------------------------------

def haar_wavelet_forward(x):
    """HaarWavelet.forward(x, rev=False): [B, C, H, W] -> [B, 4C, H/2, W/2]."""
    B, C, H, W = x.shape
    assert H % 2 == 0 and W % 2 == 0, (H, W)
    Hh, Wh = H // 2, W // 2
    rows = C * Hh                                   # one block row per 2x2 row pair
    itemsize = jnp.dtype(x.dtype).itemsize
    rt = _pick_row_tile(rows, 2 * W * itemsize, B)
    grid = (B, _cdiv(rows, rt))
    out_shape = jax.ShapeDtypeStruct((B, 4, rows, Wh), x.dtype)
    # Component axis stays a *leading* block dim -> every component store is a
    # full (rt, Wh) slab (unmasked whenever Wh is a multiple of 128).
    out_spec = pl.BlockSpec((None, 4, rt, Wh), lambda b, r: (b, 0, r, 0))
    cost = _cost(x.size, itemsize)

    if _lane_stride_ok():
        # Fully fused: x is read exactly once; the tap split happens in-kernel.
        x2 = x.reshape(B, rows, 2 * W)              # contiguous (free) reshape
        out = pl.pallas_call(
            _fwd_fused_kernel,
            out_shape=out_shape,
            grid=grid,
            in_specs=[pl.BlockSpec((None, rt, 2 * W), lambda b, r: (b, r, 0))],
            out_specs=out_spec,
            compiler_params=_compiler_params(),
            cost_estimate=cost,
        )(x2)
    else:
        # Fallback: XLA splits the taps; allow_input_fusion lets the slices fuse
        # into the kernel operand instead of materializing extra HBM arrays.
        taps = jnp.stack([x[:, :, 0::2, 0::2], x[:, :, 0::2, 1::2],
                          x[:, :, 1::2, 0::2], x[:, :, 1::2, 1::2]], axis=1)
        taps = taps.reshape(B, 4, rows, Wh)
        out = pl.pallas_call(
            functools.partial(_planar_kernel, scale=0.25),
            out_shape=out_shape,
            grid=grid,
            in_specs=[pl.BlockSpec((None, 4, rt, Wh), lambda b, r: (b, 0, r, 0))],
            out_specs=out_spec,
            compiler_params=_compiler_params(allow_input_fusion=[True]),
            cost_estimate=cost,
        )(taps)
    # [B, 4, C*Hh, Wh] -> [B, 4C, Hh, Wh]: contiguous reshape, no data movement.
    return out.reshape(B, 4 * C, Hh, Wh)


def haar_wavelet_reverse(z):
    """HaarWavelet.forward(x, rev=True): [B, 4C, H2, W2] -> [B, C, 2*H2, 2*W2]."""
    B, C4, H2, W2 = z.shape
    assert C4 % 4 == 0, C4
    C = C4 // 4
    rows = C * H2
    itemsize = jnp.dtype(z.dtype).itemsize
    rt = _pick_row_tile(rows, 4 * W2 * itemsize, B)
    grid = (B, _cdiv(rows, rt))
    z4 = z.reshape(B, 4, rows, W2)                  # contiguous: channel = k*C + c
    in_spec = pl.BlockSpec((None, 4, rt, W2), lambda b, r: (b, 0, r, 0))
    cost = _cost(z.size, itemsize)

    if _lane_stride_ok():
        # Fused: rows come out already row/column-interleaved, so the NCHW
        # result is a contiguous reshape (no 6-D transpose pass).
        y = pl.pallas_call(
            _rev_fused_kernel,
            out_shape=jax.ShapeDtypeStruct((B, rows, 4 * W2), z.dtype),
            grid=grid,
            in_specs=[in_spec],
            out_specs=pl.BlockSpec((None, rt, 4 * W2), lambda b, r: (b, r, 0)),
            compiler_params=_compiler_params(),
            cost_estimate=cost,
        )(z4)
        return y.reshape(B, C, 2 * H2, 2 * W2)

    # Fallback: planar (di, dj) output + one XLA interleave pass.
    y = pl.pallas_call(
        functools.partial(_planar_kernel, scale=1.0),
        out_shape=jax.ShapeDtypeStruct((B, 4, rows, W2), z.dtype),
        grid=grid,
        in_specs=[in_spec],
        out_specs=pl.BlockSpec((None, 4, rt, W2), lambda b, r: (b, 0, r, 0)),
        compiler_params=_compiler_params(),
        cost_estimate=cost,
    )(z4)
    y = y.reshape(B, 2, 2, C, H2, W2)
    y = jnp.transpose(y, (0, 3, 4, 1, 5, 2))
    return y.reshape(B, C, 2 * H2, 2 * W2)


def haar_wavelet(x, rev=False):
    """Matches HaarWavelet.forward(x, rev)."""
    return haar_wavelet_reverse(x) if rev else haar_wavelet_forward(x)


# ----------------------------- pure-JAX references ----------------------------

def _haar_forward_reference(x):
    """Mirror of the PyTorch rev=False branch (grouped conv, /4, transpose)."""
    B, C, H, W = x.shape
    w = jnp.ones((4, 1, 2, 2), jnp.float32)
    w = w.at[1, 0, 0, 1].set(-1.0).at[1, 0, 1, 1].set(-1.0)
    w = w.at[2, 0, 1, 0].set(-1.0).at[2, 0, 1, 1].set(-1.0)
    w = w.at[3, 0, 1, 0].set(-1.0).at[3, 0, 0, 1].set(-1.0)
    w = jnp.concatenate([w] * C, axis=0)            # [4C, 1, 2, 2]
    out = jax.lax.conv_general_dilated(
        x.astype(jnp.float32), w, window_strides=(2, 2), padding="VALID",
        dimension_numbers=("NCHW", "OIHW", "NCHW"),
        feature_group_count=C) / 4.0
    out = out.reshape(B, C, 4, H // 2, W // 2)
    out = jnp.transpose(out, (0, 2, 1, 3, 4))
    return out.reshape(B, 4 * C, H // 2, W // 2)


def _haar_reverse_reference(z):
    """Mirror of the PyTorch rev=True branch (grouped conv_transpose2d, stride 2;
    with stride == kernel == 2 it is the non-overlapping scatter below)."""
    B, C4, H2, W2 = z.shape
    C = C4 // 4
    zk = z.reshape(B, 4, C, H2, W2).astype(jnp.float32)
    w = jnp.ones((4, 2, 2), jnp.float32)
    w = w.at[1, 0, 1].set(-1.0).at[1, 1, 1].set(-1.0)
    w = w.at[2, 1, 0].set(-1.0).at[2, 1, 1].set(-1.0)
    w = w.at[3, 1, 0].set(-1.0).at[3, 0, 1].set(-1.0)
    # recon[b, c, 2i+p, 2j+q] = sum_k w[k, p, q] * z[b, k*C + c, i, j]
    r = jnp.einsum("bkcij,kpq->bcipjq", zk, w)
    return r.reshape(B, C, 2 * H2, 2 * W2)


if __name__ == "__main__":
    key = jax.random.PRNGKey(0)
    B, C, H, W = 2, 4, 16, 16
    x = jax.random.normal(key, (B, C, H, W), jnp.float32)

    fwd = jax.jit(haar_wavelet_forward)
    rev = jax.jit(haar_wavelet_reverse)

    y = jax.block_until_ready(fwd(x))
    assert y.shape == (B, 4 * C, H // 2, W // 2), y.shape
    assert bool(jnp.isfinite(y).all())

    # rev=False vs. the PyTorch-equivalent grouped conv.
    y_ref = _haar_forward_reference(x)
    assert bool(jnp.allclose(y, y_ref, atol=1e-5, rtol=1e-5))

    # rev=True vs. the PyTorch-equivalent grouped conv_transpose (and round trip).
    x_rec = jax.block_until_ready(rev(y))
    x_rec_ref = _haar_reverse_reference(y)
    assert bool(jnp.allclose(x_rec, x_rec_ref, atol=1e-5, rtol=1e-5))
    assert bool(jnp.allclose(x_rec, x, atol=1e-5, rtol=1e-5))

    print("KERNEL_OK")
</pallas_src>

<mosaic_0001>
module attributes {stable_mosaic.version = 11 : i64} {
  func.func @_planar_kernel(%arg0: i32, %arg1: i32, %arg2: memref<1x4x32x8xf32, #tpu.memory_space<vmem>>, %arg3: memref<1x4x32x8xf32, #tpu.memory_space<vmem>>) attributes {dimension_semantics = [#tpu.dimension_semantics<parallel>, #tpu.dimension_semantics<parallel>], iteration_bounds = array<i64: 2, 1>, scalar_prefetch = 0 : i64, scratch_operands = 0 : i64, tpu.core_type = #tpu.core_type<tc>, window_params = [{transform_indices = @transform_0, window_bounds = array<i64: 1, 4, 32, 8>}, {transform_indices = @transform_1, window_bounds = array<i64: 1, 4, 32, 8>}]} {
    %c0 = arith.constant 0 : index
    %c0_0 = arith.constant 0 : index
    %c0_1 = arith.constant 0 : index
    %c0_2 = arith.constant 0 : index
    %0 = vector.load %arg2[%c0, %c0_0, %c0_1, %c0_2] : memref<1x4x32x8xf32, #tpu.memory_space<vmem>>, vector<1x1x32x8xf32>
    %1 = vector.shape_cast %0 : vector<1x1x32x8xf32> to vector<32x8xf32>
    %c0_3 = arith.constant 0 : index
    %c1 = arith.constant 1 : index
    %c0_4 = arith.constant 0 : index
    %c0_5 = arith.constant 0 : index
    %2 = vector.load %arg2[%c0_3, %c1, %c0_4, %c0_5] : memref<1x4x32x8xf32, #tpu.memory_space<vmem>>, vector<1x1x32x8xf32>
    %3 = vector.shape_cast %2 : vector<1x1x32x8xf32> to vector<32x8xf32>
    %c0_6 = arith.constant 0 : index
    %c2 = arith.constant 2 : index
    %c0_7 = arith.constant 0 : index
    %c0_8 = arith.constant 0 : index
    %4 = vector.load %arg2[%c0_6, %c2, %c0_7, %c0_8] : memref<1x4x32x8xf32, #tpu.memory_space<vmem>>, vector<1x1x32x8xf32>
    %5 = vector.shape_cast %4 : vector<1x1x32x8xf32> to vector<32x8xf32>
    %c0_9 = arith.constant 0 : index
    %c3 = arith.constant 3 : index
    %c0_10 = arith.constant 0 : index
    %c0_11 = arith.constant 0 : index
    %6 = vector.load %arg2[%c0_9, %c3, %c0_10, %c0_11] : memref<1x4x32x8xf32, #tpu.memory_space<vmem>>, vector<1x1x32x8xf32>
    %7 = vector.shape_cast %6 : vector<1x1x32x8xf32> to vector<32x8xf32>
    %8 = arith.addf %1, %3 : vector<32x8xf32>
    %9 = arith.subf %1, %3 : vector<32x8xf32>
    %10 = arith.addf %5, %7 : vector<32x8xf32>
    %11 = arith.subf %5, %7 : vector<32x8xf32>
    %12 = arith.addf %8, %10 : vector<32x8xf32>
    %13 = arith.addf %9, %11 : vector<32x8xf32>
    %14 = arith.subf %8, %10 : vector<32x8xf32>
    %15 = arith.subf %9, %11 : vector<32x8xf32>
    %cst = arith.constant 2.500000e-01 : f32
    %16 = vector.broadcast %cst : f32 to vector<32x8xf32>
    %17 = arith.mulf %12, %16 : vector<32x8xf32>
    %c0_12 = arith.constant 0 : index
    %c0_13 = arith.constant 0 : index
    %c0_14 = arith.constant 0 : index
    %c0_15 = arith.constant 0 : index
    %18 = vector.load %arg3[%c0_12, %c0_13, %c0_14, %c0_15] : memref<1x4x32x8xf32, #tpu.memory_space<vmem>>, vector<1x1x32x8xf32>
    %19 = vector.shape_cast %18 : vector<1x1x32x8xf32> to vector<32x8xf32>
    %20 = vector.shape_cast %17 : vector<32x8xf32> to vector<1x1x32x8xf32>
    tpu.vector_store %arg3[%c0_12, %c0_13, %c0_14, %c0_15], %20 {strides = array<i32>} : memref<1x4x32x8xf32, #tpu.memory_space<vmem>>, vector<1x1x32x8xf32>,
    %cst_16 = arith.constant 2.500000e-01 : f32
    %21 = vector.broadcast %cst_16 : f32 to vector<32x8xf32>
    %22 = arith.mulf %13, %21 : vector<32x8xf32>
    %c0_17 = arith.constant 0 : index
    %c1_18 = arith.constant 1 : index
    %c0_19 = arith.constant 0 : index
    %c0_20 = arith.constant 0 : index
    %23 = vector.load %arg3[%c0_17, %c1_18, %c0_19, %c0_20] : memref<1x4x32x8xf32, #tpu.memory_space<vmem>>, vector<1x1x32x8xf32>
    %24 = vector.shape_cast %23 : vector<1x1x32x8xf32> to vector<32x8xf32>
    %25 = vector.shape_cast %22 : vector<32x8xf32> to vector<1x1x32x8xf32>
    tpu.vector_store %arg3[%c0_17, %c1_18, %c0_19, %c0_20], %25 {strides = array<i32>} : memref<1x4x32x8xf32, #tpu.memory_space<vmem>>, vector<1x1x32x8xf32>,
    %cst_21 = arith.constant 2.500000e-01 : f32
    %26 = vector.broadcast %cst_21 : f32 to vector<32x8xf32>
    %27 = arith.mulf %14, %26 : vector<32x8xf32>
    %c0_22 = arith.constant 0 : index
    %c2_23 = arith.constant 2 : index
    %c0_24 = arith.constant 0 : index
    %c0_25 = arith.constant 0 : index
    %28 = vector.load %arg3[%c0_22, %c2_23, %c0_24, %c0_25] : memref<1x4x32x8xf32, #tpu.memory_space<vmem>>, vector<1x1x32x8xf32>
    %29 = vector.shape_cast %28 : vector<1x1x32x8xf32> to vector<32x8xf32>
    %30 = vector.shape_cast %27 : vector<32x8xf32> to vector<1x1x32x8xf32>
    tpu.vector_store %arg3[%c0_22, %c2_23, %c0_24, %c0_25], %30 {strides = array<i32>} : memref<1x4x32x8xf32, #tpu.memory_space<vmem>>, vector<1x1x32x8xf32>,
    %cst_26 = arith.constant 2.500000e-01 : f32
    %31 = vector.broadcast %cst_26 : f32 to vector<32x8xf32>
    %32 = arith.mulf %15, %31 : vector<32x8xf32>
    %c0_27 = arith.constant 0 : index
    %c3_28 = arith.constant 3 : index
    %c0_29 = arith.constant 0 : index
    %c0_30 = arith.constant 0 : index
    %33 = vector.load %arg3[%c0_27, %c3_28, %c0_29, %c0_30] : memref<1x4x32x8xf32, #tpu.memory_space<vmem>>, vector<1x1x32x8xf32>
    %34 = vector.shape_cast %33 : vector<1x1x32x8xf32> to vector<32x8xf32>
    %35 = vector.shape_cast %32 : vector<32x8xf32> to vector<1x1x32x8xf32>
    tpu.vector_store %arg3[%c0_27, %c3_28, %c0_29, %c0_30], %35 {strides = array<i32>} : memref<1x4x32x8xf32, #tpu.memory_space<vmem>>, vector<1x1x32x8xf32>,
    return
  }
  func.func @transform_0(%arg0: i32, %arg1: i32) -> (i32, i32, i32, i32) {
    %c0_i32 = arith.constant 0 : i32
    %c0_i32_0 = arith.constant 0 : i32
    %c0_i32_1 = arith.constant 0 : i32
    return %arg0, %c0_i32, %arg1, %c0_i32_0 : i32, i32, i32, i32
  }
  func.func @transform_1(%arg0: i32, %arg1: i32) -> (i32, i32, i32, i32) {
    %c0_i32 = arith.constant 0 : i32
    %c0_i32_0 = arith.constant 0 : i32
    %c0_i32_1 = arith.constant 0 : i32
    return %arg0, %c0_i32, %arg1, %c0_i32_0 : i32, i32, i32, i32
  }
}

</mosaic_0001>

<llo_original>
// kernel: haar_wavelet_forward.1
$region0: #{haar_wavelet_forward.1}
  #allocation0 [shape = 'u32[]', space=smem, size = 0x4, offset = 0x4, fixed_abs, tag = 'smem constant byte address 0x4 - core index']
  #allocation1 [shape = 'u32[144,128]{1,0:T(1,128)}', space=vmem, size = 0x12000, scoped, tag = 'internal scratch']
  %s0 = inlined_call_operand.vmem [shape: f32[2,4,32,8], index: 0, kind: input, shape index: {}]
  %s1 = inlined_call_operand.vmem [shape: f32[2,4,32,8], index: 1, kind: output, shape index: {}]
  %s2 = sld [smem:[#allocation0]]
  $region37: #{haar_wavelet_forward.1} parent=0
    _
  %s4 = ssub.s32 1, %s2
  %s5 = scalar_select 0, %s4, %s2
  loop: start=0, step=1, limit=4
  $region2: #{haar_wavelet_forward.1} parent=0 // loop_pre_header
    _
  $region3: #{haar_wavelet_forward.1} parent=0 // loop_header
    %s7 = sphi 0, %s11
    %p8 = scmp.ge.s32.totalorder %s7, 4
    %s14 = sphi 0, %s26
    %s15 = sphi 0, %s22
    %s16 = sphi 0, %s14
    %s17 = sphi 0, %s15
    %s18 = sphi 0, %s16
    %s19 = sphi 0, %s17
    %s31 = sphi 0, %s33
    %s34 = sphi 0, %s31
    %s35 = sphi 0, %s34
    %s51 = sphi 0, %s35
    %s59 = sphi 0, %s61
    %s62 = sphi 0, %s59
    %s63 = sphi 0, %s62
    %s79 = sphi 0, %s63
  $region4: #{haar_wavelet_forward.1} parent=0 // loop_header_branch
    %10 = sbr.rel (%p8) target = $region8
  $region5: #{haar_wavelet_forward.1} parent=0 // loop_body
    %s12 = ssub.s32 %s7, 1
    %s13 = ssub.s32 %s7, 2
    %s20 = sadd.s32 1, %s15
    %p21 = scmp.ge.s32.totalorder %s20, 1
    %s22 = scalar_select %p21, 0, %s20
    %s23 = sadd.s32 1, %s14
    %s24 = scalar_select %p21, %s23, %s14
    %p25 = scmp.ge.s32.totalorder %s24, 2
    %s26 = scalar_select %p25, 0, %s24
    %s27 = ssub.s32 %s14, %s26
    %s28 = ssub.s32 %s15, %s22
    %s29 = sor.u32 %s27, %s28
    %p30 = scmp.eq.s32.totalorder %s29, 0
    %s32 = sadd.s32 %s31, 1
    %s33 = scalar_select %p30, %s31, %s32
    %p36 = pneg %p30
    %p37 = scmp.eq.s32.totalorder %s7, 1
    %p38 = por %p36, %p37
    %p39 = scmp.ne.s32.totalorder %s31, %s34
    %p40 = scmp.eq.s32.totalorder %s7, 0
    %p41 = por %p39, %p40
    %p42 = scmp.ne.s32.totalorder %s31, %s34
    %p43 = scmp.eq.s32.totalorder %s12, 1
    %p44 = por %p42, %p43
    %p45 = scmp.ne.s32.totalorder %s34, %s35
    %p46 = scmp.eq.s32.totalorder %s12, 0
    %p47 = por %p45, %p46
    %p48 = scmp.ne.s32.totalorder %s34, %s35
    %p49 = scmp.eq.s32.totalorder %s13, 1
    %p50 = por %p48, %p49
    %p52 = scmp.ne.s32.totalorder %s35, %s51
    %p53 = scmp.eq.s32.totalorder %s13, 0
    %p54 = por %p52, %p53
    %s55 = ssub.s32 %s14, %s26
    %s56 = ssub.s32 %s15, %s22
    %s57 = sor.u32 %s55, %s56
    %p58 = scmp.eq.s32.totalorder %s57, 0
    %s60 = sadd.s32 %s59, 1
    %s61 = scalar_select %p58, %s59, %s60
    %p64 = pneg %p58
    %p65 = scmp.eq.s32.totalorder %s7, 1
    %p66 = por %p64, %p65
    %p67 = scmp.ne.s32.totalorder %s59, %s62
    %p68 = scmp.eq.s32.totalorder %s7, 0
    %p69 = por %p67, %p68
    %p70 = scmp.ne.s32.totalorder %s59, %s62
    %p71 = scmp.eq.s32.totalorder %s12, 1
    %p72 = por %p70, %p71
    %p73 = scmp.ne.s32.totalorder %s62, %s63
    %p74 = scmp.eq.s32.totalorder %s12, 0
    %p75 = por %p73, %p74
    %p76 = scmp.ne.s32.totalorder %s62, %s63
    %p77 = scmp.eq.s32.totalorder %s13, 1
    %p78 = por %p76, %p77
    %p80 = scmp.ne.s32.totalorder %s63, %s79
    %p81 = scmp.eq.s32.totalorder %s13, 0
    %p82 = por %p80, %p81
    %p83 = scmp.le.s32.totalorder 1, %s7
    %p84 = scmp.lt.s32.totalorder %s7, 3
    %p85 = pnand %p83, %p84
    %p86 = pneg %p85
    // Predicated region
    $region9: #{haar_wavelet_forward.1} parent=5 // pred_check
      _
    $region10: #{haar_wavelet_forward.1} parent=5 // pred_check_branch
      %88 = sbr.rel (%p85) target = $region12
    $region11: #{haar_wavelet_forward.1} parent=5 // pred_region
      %s89 = ssub.s32 %s7, 1
    $region12: #{haar_wavelet_forward.1} parent=5 // pred_fallthru
      _
    %p90 = scmp.lt.s32.totalorder %s7, 2
    // Predicated region
    $region13: #{haar_wavelet_forward.1} parent=5 // pred_check
      %p91 = pneg %p90
    $region14: #{haar_wavelet_forward.1} parent=5 // pred_check_branch
      %93 = sbr.rel (%p91) target = $region16
    $region15: #{haar_wavelet_forward.1} parent=5 // pred_region
      // Predicated region
      $region17: #{haar_wavelet_forward.1} parent=15 // pred_check
        %p94 = pneg %p41
      $region18: #{haar_wavelet_forward.1} parent=15 // pred_check_branch
        %96 = sbr.rel (%p94) target = $region20
      $region19: #{haar_wavelet_forward.1} parent=15 // pred_region
        %s97 = smul.u32 4, %s15
        %p98 = scmp.lt.s32.totalorder %s14, 1
        %s99 = scalar_select %p98, %s14, 1
        %p100 = scmp.lt.s32.totalorder %s97, 3
        %s101 = scalar_select %p100, %s97, 3
        %s102 = smul.addr %s99, 16
        %s103 = sadd.s32 %s101, %s102
        %s104 = smul.addr %s103, 8
        %s105 = scalar_lea.vmem %s0, %s104
        %s106 = smul.u32 4, %s15
      $region20: #{haar_wavelet_forward.1} parent=15 // pred_fallthru
        _
    $region16: #{haar_wavelet_forward.1} parent=5 // pred_fallthru
      _
    %p107 = scmp.le.s32.totalorder 1, %s7
    %p108 = scmp.lt.s32.totalorder %s7, 3
    %p109 = pnand %p107, %p108
    %p110 = pneg %p109
    // Predicated region
    $region21: #{haar_wavelet_forward.1} parent=5 // pred_check
      _
    $region22: #{haar_wavelet_forward.1} parent=5 // pred_check_branch
      %112 = sbr.rel (%p109) target = $region24
    $region23: #{haar_wavelet_forward.1} parent=5 // pred_region
      %s113 = ssub.s32 %s7, 1
      %s114 = smul.u32 4, %s17
      %p115 = scmp.lt.s32.totalorder %s16, 1
      %s116 = scalar_select %p115, %s16, 1
      %p117 = scmp.lt.s32.totalorder %s114, 3
      %s118 = scalar_select %p117, %s114, 3
      %s119 = smul.addr %s116, 16
      %s120 = sadd.s32 %s118, %s119
      %s121 = smul.addr %s120, 8
      %s122 = scalar_lea.vmem %s0, %s121
      %p123 = pneg %p47
      %p124 = pneg %p44
      %p125 = pneg %p75
      %p126 = pneg %p72
      %s127 = smul.u32 4, %s17
      %p128 = scmp.lt.s32.totalorder %s16, 1
      %s129 = scalar_select %p128, %s16, 1
      %p130 = scmp.lt.s32.totalorder %s127, 3
      %s131 = scalar_select %p130, %s127, 3
      %s132 = smul.addr %s129, 16
      %s133 = sadd.s32 %s131, %s132
      %s134 = smul.addr %s133, 8
      %s135 = scalar_lea.vmem %s1, %s134
      %s136 = smul.u32 4, %s17
      %p137 = scmp.lt.s32.totalorder %s16, 1
      %s138 = scalar_select %p137, %s16, 1
      %p139 = scmp.lt.s32.totalorder %s136, 3
      %s140 = scalar_select %p139, %s136, 3
      %s141 = smul.addr %s138, 16
      %s142 = sadd.s32 %s140, %s141
      %s143 = smul.addr %s142, 8
      %s144 = scalar_lea.vmem %s0, %s143
      %s145 = smul.u32 4, %s17
      %s146 = smul.u32 4, %s17
      %p147 = scmp.lt.s32.totalorder %s16, 1
      %s148 = scalar_select %p147, %s16, 1
      %p149 = scmp.lt.s32.totalorder %s146, 3
      %s150 = scalar_select %p149, %s146, 3
      %s151 = smul.addr %s148, 16
      %s152 = sadd.s32 %s150, %s151
      %s153 = smul.addr %s152, 8
      %s154 = scalar_lea.vmem %s1, %s153
      %s155 = smul.u32 4, %s17
      %v156 = vld [vmem:[%s144] sm:$0xff]
      %v157 = vld [vmem:[%s144 + $0x8] sm:$0xff]
      %v158 = vld [vmem:[%s144 + $0x10] sm:$0xff]
      %v159 = vld [vmem:[%s144 + $0x18] sm:$0xff]
      %s160 = scalar_lea.vmem %s144, 32
      %v161 = vld [vmem:[%s160] sm:$0xff]
      %v162 = vld [vmem:[%s160 + $0x8] sm:$0xff]
      %v163 = vld [vmem:[%s160 + $0x10] sm:$0xff]
      %v164 = vld [vmem:[%s160 + $0x18] sm:$0xff]
      %s165 = scalar_lea.vmem %s144, 64
      %v166 = vld [vmem:[%s165] sm:$0xff]
      %v167 = vld [vmem:[%s165 + $0x8] sm:$0xff]
      %v168 = vld [vmem:[%s165 + $0x10] sm:$0xff]
      %v169 = vld [vmem:[%s165 + $0x18] sm:$0xff]
      %s170 = scalar_lea.vmem %s144, 96
      %v171 = vld [vmem:[%s170] sm:$0xff]
      %v172 = vld [vmem:[%s170 + $0x8] sm:$0xff]
      %v173 = vld [vmem:[%s170 + $0x10] sm:$0xff]
      %v174 = vld [vmem:[%s170 + $0x18] sm:$0xff]
      %v175 = vadd.f32 %v156, %v161
      %v176 = vadd.f32 %v157, %v162
      %v177 = vadd.f32 %v158, %v163
      %v178 = vadd.f32 %v159, %v164
      %v179 = vsub.f32 %v156, %v161
      %v180 = vsub.f32 %v157, %v162
      %v181 = vsub.f32 %v158, %v163
      %v182 = vsub.f32 %v159, %v164
      %v183 = vadd.f32 %v166, %v171
      %v184 = vadd.f32 %v167, %v172
      %v185 = vadd.f32 %v168, %v173
      %v186 = vadd.f32 %v169, %v174
      %v187 = vsub.f32 %v166, %v171
      %v188 = vsub.f32 %v167, %v172
      %v189 = vsub.f32 %v168, %v173
      %v190 = vsub.f32 %v169, %v174
      %v191 = vadd.f32 %v175, %v183
      %v192 = vadd.f32 %v176, %v184
      %v193 = vadd.f32 %v177, %v185
      %v194 = vadd.f32 %v178, %v186
      %v195 = vadd.f32 %v179, %v187
      %v196 = vadd.f32 %v180, %v188
      %v197 = vadd.f32 %v181, %v189
      %v198 = vadd.f32 %v182, %v190
      %v199 = vsub.f32 %v175, %v183
      %v200 = vsub.f32 %v176, %v184
      %v201 = vsub.f32 %v177, %v185
      %v202 = vsub.f32 %v178, %v186
      %v203 = vsub.f32 %v179, %v187
      %v204 = vsub.f32 %v180, %v188
      %v205 = vsub.f32 %v181, %v189
      %v206 = vsub.f32 %v182, %v190
      %v207 = vmul.f32 %v191, 0.25
      %v208 = vmul.f32 %v192, 0.25
      %v209 = vmul.f32 %v193, 0.25
      %v210 = vmul.f32 %v194, 0.25
      %vm211 = vcmask 64512
      %212 = vst.msk [vmem:[%s154] sm:$0xff] %vm211, %v207
      %213 = vst.msk [vmem:[%s154 + $0x8] sm:$0xff] %vm211, %v208
      %214 = vst.msk [vmem:[%s154 + $0x10] sm:$0xff] %vm211, %v209
      %215 = vst.msk [vmem:[%s154 + $0x18] sm:$0xff] %vm211, %v210
      %v216 = vmul.f32 %v195, 0.25
      %v217 = vmul.f32 %v196, 0.25
      %v218 = vmul.f32 %v197, 0.25
      %v219 = vmul.f32 %v198, 0.25
      %s220 = scalar_lea.vmem %s154, 32
      %221 = vst.msk [vmem:[%s220] sm:$0xff] %vm211, %v216
      %222 = vst.msk [vmem:[%s220 + $0x8] sm:$0xff] %vm211, %v217
      %223 = vst.msk [vmem:[%s220 + $0x10] sm:$0xff] %vm211, %v218
      %224 = vst.msk [vmem:[%s220 + $0x18] sm:$0xff] %vm211, %v219
      %v225 = vmul.f32 %v199, 0.25
      %v226 = vmul.f32 %v200, 0.25
      %v227 = vmul.f32 %v201, 0.25
      %v228 = vmul.f32 %v202, 0.25
      %s229 = scalar_lea.vmem %s154, 64
      %230 = vst.msk [vmem:[%s229] sm:$0xff] %vm211, %v225
      %231 = vst.msk [vmem:[%s229 + $0x8] sm:$0xff] %vm211, %v226
      %232 = vst.msk [vmem:[%s229 + $0x10] sm:$0xff] %vm211, %v227
      %233 = vst.msk [vmem:[%s229 + $0x18] sm:$0xff] %vm211, %v228
      %v234 = vmul.f32 %v203, 0.25
      %v235 = vmul.f32 %v204, 0.25
      %v236 = vmul.f32 %v205, 0.25
      %v237 = vmul.f32 %v206, 0.25
      %s238 = scalar_lea.vmem %s154, 96
      %239 = vst.msk [vmem:[%s238] sm:$0xff] %vm211, %v234
      %240 = vst.msk [vmem:[%s238 + $0x8] sm:$0xff] %vm211, %v235
      %241 = vst.msk [vmem:[%s238 + $0x10] sm:$0xff] %vm211, %v236
      %242 = vst.msk [vmem:[%s238 + $0x18] sm:$0xff] %vm211, %v237
      %s243 = smul.u32 4, %s17
      %p244 = scmp.lt.s32.totalorder %s16, 1
      %s245 = scalar_select %p244, %s16, 1
      %p246 = scmp.lt.s32.totalorder %s243, 3
      %s247 = scalar_select %p246, %s243, 3
      %s248 = smul.addr %s245, 16
      %s249 = sadd.s32 %s247, %s248
      %s250 = smul.addr %s249, 8
      %s251 = scalar_lea.vmem %s1, %s250
      // Predicated region
      $region25: #{haar_wavelet_forward.1} parent=23 // pred_check
        %p252 = pneg %p72
      $region26: #{haar_wavelet_forward.1} parent=23 // pred_check_branch
        %254 = sbr.rel (%p252) target = $region28
      $region27: #{haar_wavelet_forward.1} parent=23 // pred_region
        %s255 = smul.u32 4, %s17
      $region28: #{haar_wavelet_forward.1} parent=23 // pred_fallthru
        _
    $region24: #{haar_wavelet_forward.1} parent=5 // pred_fallthru
      _
    %p256 = scmp.le.s32.totalorder 2, %s7
    // Predicated region
    $region29: #{haar_wavelet_forward.1} parent=5 // pred_check
      %p257 = pneg %p256
    $region30: #{haar_wavelet_forward.1} parent=5 // pred_check_branch
      %259 = sbr.rel (%p257) target = $region32
    $region31: #{haar_wavelet_forward.1} parent=5 // pred_region
      %s260 = ssub.s32 %s7, 2
      // Predicated region
      $region33: #{haar_wavelet_forward.1} parent=31 // pred_check
        %p261 = pneg %p78
      $region34: #{haar_wavelet_forward.1} parent=31 // pred_check_branch
        %263 = sbr.rel (%p261) target = $region36
      $region35: #{haar_wavelet_forward.1} parent=31 // pred_region
        %s264 = smul.u32 4, %s19
        %p265 = scmp.lt.s32.totalorder %s18, 1
        %s266 = scalar_select %p265, %s18, 1
        %p267 = scmp.lt.s32.totalorder %s264, 3
        %s268 = scalar_select %p267, %s264, 3
        %s269 = smul.addr %s266, 16
        %s270 = sadd.s32 %s268, %s269
        %s271 = smul.addr %s270, 8
        %s272 = scalar_lea.vmem %s1, %s271
      $region36: #{haar_wavelet_forward.1} parent=31 // pred_fallthru
        _
    $region32: #{haar_wavelet_forward.1} parent=5 // pred_fallthru
      _
  $region6: #{haar_wavelet_forward.1} parent=0 // loop_footer
    %s11 = sadd.s32 1, %s7
  $region7: #{haar_wavelet_forward.1} parent=0 // loop_footer_branch
    %6 = sbr.rel target = $region3
  $region8: #{haar_wavelet_forward.1} parent=0 // loop_exit
    _

</llo_original>
